<compile_context>
chip_gen: v5e
topology: v5e:2x2
jax: 0.10.0
libtpu: 0.0.40
codegen_flags: <defaults>
</compile_context>

<pallas_src>
import functools

import jax
import jax.numpy as jnp
import numpy as np
from jax.experimental import pallas as pl
from jax.experimental.pallas import tpu as pltpu

KS = (3, 4, 5)
LANE = 128


def similarity_kernel(e0_ref, e1_ref,
                      w3_ref, b3_ref,
                      w4_ref, b4_ref,
                      w5_ref, b5_ref,
                      fcw_ref, fcb_ref,
                      out_ref, *, L, D, Cp):
    """Forward pass (post-embedding) for one batch tile of both sentences.

    e{0,1}_ref : [TB, L, D]  f32  embedded sentence tile (VMEM)
    w{K}_ref   : [K*D, Cp]   f32  im2col-flattened conv weight (Co zero-padded to Cp)
    b{K}_ref   : [1, Cp]     f32
    fcw_ref    : [6, Cp]     f32  final linear weight, reshaped + zero-padded
    fcb_ref    : [1, 1]      f32
    out_ref    : [TB, 1]     f32  sigmoid probability
    """
    TB = e0_ref.shape[0]
    e0 = e0_ref[...]
    e1 = e1_ref[...]

    def conv_pool_pair(w_ref, b_ref, K):
        # One im2col matmul for BOTH sentences: contraction = K*D, lane-dense N = Cp.
        T = L - K + 1

        def im2col(e):
            # [TB, T, K*D]: window t covers rows t..t+K-1, column order (k, d)
            # matching the flattened weight layout.
            return jnp.concatenate([e[:, k:k + T, :] for k in range(K)], axis=-1)

        x = jnp.concatenate([im2col(e0), im2col(e1)], axis=0)            # [2*TB, T, K*D]
        x = x.reshape(2 * TB * T, K * D)
        s = jnp.dot(x, w_ref[...], preferred_element_type=jnp.float32)   # [2*TB*T, Cp]
        s = s.reshape(2, TB, T, Cp)
        # Max over time first, then bias + ReLU once:
        #   max_t(relu(x_t + b)) == relu(max_t(x_t) + b)
        pooled = jnp.max(s, axis=2)                                       # [2, TB, Cp]
        pooled = jnp.maximum(pooled + b_ref[...], 0.0)
        return pooled[0], pooled[1]

    p3_0, p3_1 = conv_pool_pair(w3_ref, b3_ref, 3)
    p4_0, p4_1 = conv_pool_pair(w4_ref, b4_ref, 4)
    p5_0, p5_1 = conv_pool_pair(w5_ref, b5_ref, 5)

    # Final linear layer without lane-offset concatenates and without an N=1
    # MXU pass: VPU multiplies + lane reductions against the six fcw rows.
    fcw = fcw_ref[...]                                                    # [6, Cp]
    logits = (jnp.sum(p3_0 * fcw[0:1, :], axis=-1, keepdims=True)
              + jnp.sum(p4_0 * fcw[1:2, :], axis=-1, keepdims=True)
              + jnp.sum(p5_0 * fcw[2:3, :], axis=-1, keepdims=True)
              + jnp.sum(p3_1 * fcw[3:4, :], axis=-1, keepdims=True)
              + jnp.sum(p4_1 * fcw[4:5, :], axis=-1, keepdims=True)
              + jnp.sum(p5_1 * fcw[5:6, :], axis=-1, keepdims=True)
              + fcb_ref[...])
    out_ref[...] = jax.nn.sigmoid(logits)                                 # [TB, 1]


def _pack_params(params, Cp):
    """Flatten conv weights for im2col and zero-pad the channel dim to Cp lanes."""
    Co = params["b3"].shape[-1]
    pad = Cp - Co
    packed = {}
    for K in KS:
        w = params[f"w{K}"].reshape(-1, Co)                     # [K*D, Co]
        packed[f"w{K}"] = jnp.pad(w, ((0, 0), (0, pad)))        # [K*D, Cp]
        packed[f"b{K}"] = jnp.pad(params[f"b{K}"], ((0, 0), (0, pad)))
    fcw = params["fcw"].reshape(2 * len(KS), Co)                # [6, Co]
    packed["fcw"] = jnp.pad(fcw, ((0, 0), (0, pad)))            # [6, Cp]
    packed["fcb"] = params["fcb"]
    return packed


def similarity_cnn_forward(s0, s1, params, *, batch_tile=128):
    """s0, s1: int32 token ids [B, L]. Returns sigmoid similarity [B, 1]."""
    emb = params["embedding"]                                    # [V+1, D]
    # Embedding lookup (gather) as JAX glue outside the kernel.
    e0 = jnp.take(emb, s0, axis=0).astype(jnp.float32)           # [B, L, D]
    e1 = jnp.take(emb, s1, axis=0).astype(jnp.float32)
    B, L, D = e0.shape
    Co = params["b3"].shape[-1]
    assert L >= max(KS), "sequence length must be >= largest conv kernel size"

    Cp = ((Co + LANE - 1) // LANE) * LANE                        # lane-dense channels
    pk = _pack_params(params, Cp)

    # Batch grid: tile of TB rows per program (double-buffered DMA, parallel axis).
    TB = B if B <= batch_tile else batch_tile
    assert B % TB == 0, "batch must be a multiple of the batch tile"
    grid = (B // TB,)

    kernel = functools.partial(similarity_kernel, L=L, D=D, Cp=Cp)

    def full(shape):
        nd = len(shape)
        return pl.BlockSpec(shape, lambda i, _nd=nd: (0,) * _nd)  # untiled VMEM resident

    in_specs = [
        pl.BlockSpec((TB, L, D), lambda i: (i, 0, 0)),            # e0 batch tile
        pl.BlockSpec((TB, L, D), lambda i: (i, 0, 0)),            # e1 batch tile
        full(pk["w3"].shape), full(pk["b3"].shape),
        full(pk["w4"].shape), full(pk["b4"].shape),
        full(pk["w5"].shape), full(pk["b5"].shape),
        full(pk["fcw"].shape), full(pk["fcb"].shape),
    ]
    out_specs = pl.BlockSpec((TB, 1), lambda i: (i, 0))

    return pl.pallas_call(
        kernel,
        out_shape=jax.ShapeDtypeStruct((B, 1), jnp.float32),
        grid=grid,
        in_specs=in_specs,
        out_specs=out_specs,
        compiler_params=pltpu.CompilerParams(dimension_semantics=("parallel",)),
    )(e0, e1,
      pk["w3"], pk["b3"], pk["w4"], pk["b4"], pk["w5"], pk["b5"],
      pk["fcw"], pk["fcb"])


def reference_forward(s0, s1, params):
    """Pure-JAX reference mirroring the PyTorch forward (for verification)."""
    emb = params["embedding"]

    def branch(s):
        e = jnp.take(emb, s, axis=0)                             # [B, L, D]
        L = e.shape[1]
        pools = []
        for K, wk, bk in ((3, params["w3"], params["b3"]),
                          (4, params["w4"], params["b4"]),
                          (5, params["w5"], params["b5"])):
            outs = []
            for t in range(L - K + 1):
                win = e[:, t:t + K, :]                           # [B, K, D]
                s_t = jnp.einsum("bkd,kdc->bc", win, wk) + bk
                outs.append(jax.nn.relu(s_t))
            pools.append(jnp.max(jnp.stack(outs, axis=0), axis=0))
        return jnp.concatenate(pools, axis=1)

    final_vec = jnp.concatenate([branch(s0), branch(s1)], axis=1)
    return jax.nn.sigmoid(final_vec @ params["fcw"] + params["fcb"])


def make_params(key, vocab, D, Co):
    """Deterministic synthetic parameters with PyTorch-like init shapes."""
    ks = jax.random.split(key, 8)
    # Embedding table: vocab rows + one appended all-zero (padding) row.
    emb_core = 0.1 * jax.random.normal(ks[0], (vocab, D), jnp.float32)
    embedding = jnp.concatenate([emb_core, jnp.zeros((1, D), jnp.float32)], axis=0)

    params = {"embedding": embedding}
    for i, K in enumerate(KS):
        bound = 1.0 / np.sqrt(1 * K * D)                         # conv fan_in = in_ch*K*D
        wkey, bkey = jax.random.split(ks[1 + i])
        params[f"w{K}"] = jax.random.uniform(wkey, (K, D, Co), jnp.float32,
                                             -bound, bound)
        params[f"b{K}"] = jax.random.uniform(bkey, (1, Co), jnp.float32,
                                             -bound, bound)
    bound = 1.0 / np.sqrt(len(KS) * Co * 2)                      # fc fan_in = 3*32*2
    wkey, bkey = jax.random.split(ks[4])
    params["fcw"] = jax.random.uniform(wkey, (len(KS) * Co * 2, 1), jnp.float32,
                                       -bound, bound)
    params["fcb"] = jax.random.uniform(bkey, (1, 1), jnp.float32, -bound, bound)
    return params


if __name__ == "__main__":
    key = jax.random.PRNGKey(0)
    V, D, Co = 50, 32, 32          # small vocab, embedding dim 32, 32 filters
    B, L = 2, 8                    # batch 2, sequence length 8

    pkey, k0, k1 = jax.random.split(key, 3)
    params = make_params(pkey, V, D, Co)
    # token ids in [0, V]: index V is the appended zero (padding) embedding row
    s0 = jax.random.randint(k0, (B, L), 0, V + 1, dtype=jnp.int32)
    s1 = jax.random.randint(k1, (B, L), 0, V + 1, dtype=jnp.int32)

    out = jax.block_until_ready(similarity_cnn_forward(s0, s1, params))
    ref = jax.block_until_ready(reference_forward(s0, s1, params))

    assert out.shape == (B, 1) and out.dtype == jnp.float32
    np.testing.assert_allclose(np.asarray(out), np.asarray(ref),
                               rtol=1e-4, atol=1e-5)
    print("KERNEL_OK")
</pallas_src>

<mosaic_0001>
module attributes {stable_mosaic.version = 11 : i64} {
  func.func @similarity_kernel(%arg0: i32, %arg1: memref<2x8x32xf32, #tpu.memory_space<vmem>>, %arg2: memref<2x8x32xf32, #tpu.memory_space<vmem>>, %arg3: memref<96x128xf32, #tpu.memory_space<vmem>>, %arg4: memref<1x128xf32, #tpu.memory_space<vmem>>, %arg5: memref<128x128xf32, #tpu.memory_space<vmem>>, %arg6: memref<1x128xf32, #tpu.memory_space<vmem>>, %arg7: memref<160x128xf32, #tpu.memory_space<vmem>>, %arg8: memref<1x128xf32, #tpu.memory_space<vmem>>, %arg9: memref<6x128xf32, #tpu.memory_space<vmem>>, %arg10: memref<1x1xf32, #tpu.memory_space<vmem>>, %arg11: memref<2x1xf32, #tpu.memory_space<vmem>>) attributes {dimension_semantics = [#tpu.dimension_semantics<parallel>], iteration_bounds = array<i64: 1>, scalar_prefetch = 0 : i64, scratch_operands = 0 : i64, tpu.core_type = #tpu.core_type<tc>, window_params = [{transform_indices = @transform_0, window_bounds = array<i64: 2, 8, 32>}, {transform_indices = @transform_1, window_bounds = array<i64: 2, 8, 32>}, {pipeline_mode = #tpu.pipeline_mode<synchronous>, transform_indices = @transform_2, window_bounds = array<i64: 96, 128>}, {pipeline_mode = #tpu.pipeline_mode<synchronous>, transform_indices = @transform_3, window_bounds = array<i64: 1, 128>}, {pipeline_mode = #tpu.pipeline_mode<synchronous>, transform_indices = @transform_4, window_bounds = array<i64: 128, 128>}, {pipeline_mode = #tpu.pipeline_mode<synchronous>, transform_indices = @transform_5, window_bounds = array<i64: 1, 128>}, {pipeline_mode = #tpu.pipeline_mode<synchronous>, transform_indices = @transform_6, window_bounds = array<i64: 160, 128>}, {pipeline_mode = #tpu.pipeline_mode<synchronous>, transform_indices = @transform_7, window_bounds = array<i64: 1, 128>}, {pipeline_mode = #tpu.pipeline_mode<synchronous>, transform_indices = @transform_8, window_bounds = array<i64: 6, 128>}, {pipeline_mode = #tpu.pipeline_mode<synchronous>, transform_indices = @transform_9, window_bounds = array<i64: 1, 1>}, {transform_indices = @transform_10, window_bounds = array<i64: 2, 1>}]} {
    %c0 = arith.constant 0 : index
    %c0_0 = arith.constant 0 : index
    %c0_1 = arith.constant 0 : index
    %0 = vector.load %arg1[%c0, %c0_0, %c0_1] : memref<2x8x32xf32, #tpu.memory_space<vmem>>, vector<2x8x32xf32>
    %c0_2 = arith.constant 0 : index
    %c0_3 = arith.constant 0 : index
    %c0_4 = arith.constant 0 : index
    %1 = vector.load %arg2[%c0_2, %c0_3, %c0_4] : memref<2x8x32xf32, #tpu.memory_space<vmem>>, vector<2x8x32xf32>
    %2 = vector.extract_strided_slice %0 {offsets = [0, 0, 0], sizes = [2, 6, 32], strides = [1, 1, 1]} : vector<2x8x32xf32> to vector<2x6x32xf32>
    %3 = vector.extract_strided_slice %0 {offsets = [0, 1, 0], sizes = [2, 6, 32], strides = [1, 1, 1]} : vector<2x8x32xf32> to vector<2x6x32xf32>
    %4 = vector.extract_strided_slice %0 {offsets = [0, 2, 0], sizes = [2, 6, 32], strides = [1, 1, 1]} : vector<2x8x32xf32> to vector<2x6x32xf32>
    %5 = tpu.concatenate %2, %3, %4 in 2 : vector<2x6x32xf32>, vector<2x6x32xf32>, vector<2x6x32xf32> -> vector<2x6x96xf32>
    %6 = vector.extract_strided_slice %1 {offsets = [0, 0, 0], sizes = [2, 6, 32], strides = [1, 1, 1]} : vector<2x8x32xf32> to vector<2x6x32xf32>
    %7 = vector.extract_strided_slice %1 {offsets = [0, 1, 0], sizes = [2, 6, 32], strides = [1, 1, 1]} : vector<2x8x32xf32> to vector<2x6x32xf32>
    %8 = vector.extract_strided_slice %1 {offsets = [0, 2, 0], sizes = [2, 6, 32], strides = [1, 1, 1]} : vector<2x8x32xf32> to vector<2x6x32xf32>
    %9 = tpu.concatenate %6, %7, %8 in 2 : vector<2x6x32xf32>, vector<2x6x32xf32>, vector<2x6x32xf32> -> vector<2x6x96xf32>
    %10 = tpu.concatenate %5, %9 in 0 : vector<2x6x96xf32>, vector<2x6x96xf32> -> vector<4x6x96xf32>
    %11 = vector.shape_cast %10 : vector<4x6x96xf32> to vector<24x96xf32>
    %c0_5 = arith.constant 0 : index
    %c0_6 = arith.constant 0 : index
    %12 = vector.load %arg3[%c0_5, %c0_6] : memref<96x128xf32, #tpu.memory_space<vmem>>, vector<96x128xf32>
    %cst = arith.constant dense<0.000000e+00> : vector<24x128xf32>
    %13 = tpu.matmul %11, %12, %cst {dimension_numbers = #tpu.dot_dimension_numbers<[1], [0], [0], [1], [0, 0, 1, 1], [], []>} : vector<24x96xf32>, vector<96x128xf32>, vector<24x128xf32> -> vector<24x128xf32>
    %14 = vector.shape_cast %13 : vector<24x128xf32> to vector<2x2x6x128xf32>
    %cst_7 = arith.constant dense<0xFF800000> : vector<2x2x128xf32>
    %15 = vector.multi_reduction <maximumf>, %14, %cst_7 [2] : vector<2x2x6x128xf32> to vector<2x2x128xf32>
    %c0_8 = arith.constant 0 : index
    %c0_9 = arith.constant 0 : index
    %16 = vector.load %arg4[%c0_8, %c0_9] : memref<1x128xf32, #tpu.memory_space<vmem>>, vector<1x128xf32>
    %17 = vector.shape_cast %16 : vector<1x128xf32> to vector<1x1x128xf32>
    %18 = vector.broadcast %17 : vector<1x1x128xf32> to vector<2x2x128xf32>
    %19 = arith.addf %15, %18 : vector<2x2x128xf32>
    %cst_10 = arith.constant 0.000000e+00 : f32
    %20 = vector.broadcast %cst_10 : f32 to vector<2x2x128xf32>
    %21 = arith.maximumf %19, %20 : vector<2x2x128xf32>
    %22 = vector.extract_strided_slice %21 {offsets = [0, 0, 0], sizes = [1, 2, 128], strides = [1, 1, 1]} : vector<2x2x128xf32> to vector<1x2x128xf32>
    %23 = vector.shape_cast %22 : vector<1x2x128xf32> to vector<2x128xf32>
    %24 = vector.extract_strided_slice %21 {offsets = [1, 0, 0], sizes = [1, 2, 128], strides = [1, 1, 1]} : vector<2x2x128xf32> to vector<1x2x128xf32>
    %25 = vector.shape_cast %24 : vector<1x2x128xf32> to vector<2x128xf32>
    %26 = vector.extract_strided_slice %0 {offsets = [0, 0, 0], sizes = [2, 5, 32], strides = [1, 1, 1]} : vector<2x8x32xf32> to vector<2x5x32xf32>
    %27 = vector.extract_strided_slice %0 {offsets = [0, 1, 0], sizes = [2, 5, 32], strides = [1, 1, 1]} : vector<2x8x32xf32> to vector<2x5x32xf32>
    %28 = vector.extract_strided_slice %0 {offsets = [0, 2, 0], sizes = [2, 5, 32], strides = [1, 1, 1]} : vector<2x8x32xf32> to vector<2x5x32xf32>
    %29 = vector.extract_strided_slice %0 {offsets = [0, 3, 0], sizes = [2, 5, 32], strides = [1, 1, 1]} : vector<2x8x32xf32> to vector<2x5x32xf32>
    %30 = tpu.concatenate %26, %27, %28, %29 in 2 : vector<2x5x32xf32>, vector<2x5x32xf32>, vector<2x5x32xf32>, vector<2x5x32xf32> -> vector<2x5x128xf32>
    %31 = vector.extract_strided_slice %1 {offsets = [0, 0, 0], sizes = [2, 5, 32], strides = [1, 1, 1]} : vector<2x8x32xf32> to vector<2x5x32xf32>
    %32 = vector.extract_strided_slice %1 {offsets = [0, 1, 0], sizes = [2, 5, 32], strides = [1, 1, 1]} : vector<2x8x32xf32> to vector<2x5x32xf32>
    %33 = vector.extract_strided_slice %1 {offsets = [0, 2, 0], sizes = [2, 5, 32], strides = [1, 1, 1]} : vector<2x8x32xf32> to vector<2x5x32xf32>
    %34 = vector.extract_strided_slice %1 {offsets = [0, 3, 0], sizes = [2, 5, 32], strides = [1, 1, 1]} : vector<2x8x32xf32> to vector<2x5x32xf32>
    %35 = tpu.concatenate %31, %32, %33, %34 in 2 : vector<2x5x32xf32>, vector<2x5x32xf32>, vector<2x5x32xf32>, vector<2x5x32xf32> -> vector<2x5x128xf32>
    %36 = tpu.concatenate %30, %35 in 0 : vector<2x5x128xf32>, vector<2x5x128xf32> -> vector<4x5x128xf32>
    %37 = vector.shape_cast %36 : vector<4x5x128xf32> to vector<20x128xf32>
    %c0_11 = arith.constant 0 : index
    %c0_12 = arith.constant 0 : index
    %38 = vector.load %arg5[%c0_11, %c0_12] : memref<128x128xf32, #tpu.memory_space<vmem>>, vector<128x128xf32>
    %cst_13 = arith.constant dense<0.000000e+00> : vector<20x128xf32>
    %39 = tpu.matmul %37, %38, %cst_13 {dimension_numbers = #tpu.dot_dimension_numbers<[1], [0], [0], [1], [0, 0, 1, 1], [], []>} : vector<20x128xf32>, vector<128x128xf32>, vector<20x128xf32> -> vector<20x128xf32>
    %40 = vector.shape_cast %39 : vector<20x128xf32> to vector<2x2x5x128xf32>
    %cst_14 = arith.constant dense<0xFF800000> : vector<2x2x128xf32>
    %41 = vector.multi_reduction <maximumf>, %40, %cst_14 [2] : vector<2x2x5x128xf32> to vector<2x2x128xf32>
    %c0_15 = arith.constant 0 : index
    %c0_16 = arith.constant 0 : index
    %42 = vector.load %arg6[%c0_15, %c0_16] : memref<1x128xf32, #tpu.memory_space<vmem>>, vector<1x128xf32>
    %43 = vector.shape_cast %42 : vector<1x128xf32> to vector<1x1x128xf32>
    %44 = vector.broadcast %43 : vector<1x1x128xf32> to vector<2x2x128xf32>
    %45 = arith.addf %41, %44 : vector<2x2x128xf32>
    %cst_17 = arith.constant 0.000000e+00 : f32
    %46 = vector.broadcast %cst_17 : f32 to vector<2x2x128xf32>
    %47 = arith.maximumf %45, %46 : vector<2x2x128xf32>
    %48 = vector.extract_strided_slice %47 {offsets = [0, 0, 0], sizes = [1, 2, 128], strides = [1, 1, 1]} : vector<2x2x128xf32> to vector<1x2x128xf32>
    %49 = vector.shape_cast %48 : vector<1x2x128xf32> to vector<2x128xf32>
    %50 = vector.extract_strided_slice %47 {offsets = [1, 0, 0], sizes = [1, 2, 128], strides = [1, 1, 1]} : vector<2x2x128xf32> to vector<1x2x128xf32>
    %51 = vector.shape_cast %50 : vector<1x2x128xf32> to vector<2x128xf32>
    %52 = vector.extract_strided_slice %0 {offsets = [0, 0, 0], sizes = [2, 4, 32], strides = [1, 1, 1]} : vector<2x8x32xf32> to vector<2x4x32xf32>
    %53 = vector.extract_strided_slice %0 {offsets = [0, 1, 0], sizes = [2, 4, 32], strides = [1, 1, 1]} : vector<2x8x32xf32> to vector<2x4x32xf32>
    %54 = vector.extract_strided_slice %0 {offsets = [0, 2, 0], sizes = [2, 4, 32], strides = [1, 1, 1]} : vector<2x8x32xf32> to vector<2x4x32xf32>
    %55 = vector.extract_strided_slice %0 {offsets = [0, 3, 0], sizes = [2, 4, 32], strides = [1, 1, 1]} : vector<2x8x32xf32> to vector<2x4x32xf32>
    %56 = vector.extract_strided_slice %0 {offsets = [0, 4, 0], sizes = [2, 4, 32], strides = [1, 1, 1]} : vector<2x8x32xf32> to vector<2x4x32xf32>
    %57 = tpu.concatenate %52, %53, %54, %55, %56 in 2 : vector<2x4x32xf32>, vector<2x4x32xf32>, vector<2x4x32xf32>, vector<2x4x32xf32>, vector<2x4x32xf32> -> vector<2x4x160xf32>
    %58 = vector.extract_strided_slice %1 {offsets = [0, 0, 0], sizes = [2, 4, 32], strides = [1, 1, 1]} : vector<2x8x32xf32> to vector<2x4x32xf32>
    %59 = vector.extract_strided_slice %1 {offsets = [0, 1, 0], sizes = [2, 4, 32], strides = [1, 1, 1]} : vector<2x8x32xf32> to vector<2x4x32xf32>
    %60 = vector.extract_strided_slice %1 {offsets = [0, 2, 0], sizes = [2, 4, 32], strides = [1, 1, 1]} : vector<2x8x32xf32> to vector<2x4x32xf32>
    %61 = vector.extract_strided_slice %1 {offsets = [0, 3, 0], sizes = [2, 4, 32], strides = [1, 1, 1]} : vector<2x8x32xf32> to vector<2x4x32xf32>
    %62 = vector.extract_strided_slice %1 {offsets = [0, 4, 0], sizes = [2, 4, 32], strides = [1, 1, 1]} : vector<2x8x32xf32> to vector<2x4x32xf32>
    %63 = tpu.concatenate %58, %59, %60, %61, %62 in 2 : vector<2x4x32xf32>, vector<2x4x32xf32>, vector<2x4x32xf32>, vector<2x4x32xf32>, vector<2x4x32xf32> -> vector<2x4x160xf32>
    %64 = tpu.concatenate %57, %63 in 0 : vector<2x4x160xf32>, vector<2x4x160xf32> -> vector<4x4x160xf32>
    %65 = vector.shape_cast %64 : vector<4x4x160xf32> to vector<16x160xf32>
    %c0_18 = arith.constant 0 : index
    %c0_19 = arith.constant 0 : index
    %66 = vector.load %arg7[%c0_18, %c0_19] : memref<160x128xf32, #tpu.memory_space<vmem>>, vector<160x128xf32>
    %cst_20 = arith.constant dense<0.000000e+00> : vector<16x128xf32>
    %67 = tpu.matmul %65, %66, %cst_20 {dimension_numbers = #tpu.dot_dimension_numbers<[1], [0], [0], [1], [0, 0, 1, 1], [], []>} : vector<16x160xf32>, vector<160x128xf32>, vector<16x128xf32> -> vector<16x128xf32>
    %68 = vector.shape_cast %67 : vector<16x128xf32> to vector<2x2x4x128xf32>
    %cst_21 = arith.constant dense<0xFF800000> : vector<2x2x128xf32>
    %69 = vector.multi_reduction <maximumf>, %68, %cst_21 [2] : vector<2x2x4x128xf32> to vector<2x2x128xf32>
    %c0_22 = arith.constant 0 : index
    %c0_23 = arith.constant 0 : index
    %70 = vector.load %arg8[%c0_22, %c0_23] : memref<1x128xf32, #tpu.memory_space<vmem>>, vector<1x128xf32>
    %71 = vector.shape_cast %70 : vector<1x128xf32> to vector<1x1x128xf32>
    %72 = vector.broadcast %71 : vector<1x1x128xf32> to vector<2x2x128xf32>
    %73 = arith.addf %69, %72 : vector<2x2x128xf32>
    %cst_24 = arith.constant 0.000000e+00 : f32
    %74 = vector.broadcast %cst_24 : f32 to vector<2x2x128xf32>
    %75 = arith.maximumf %73, %74 : vector<2x2x128xf32>
    %76 = vector.extract_strided_slice %75 {offsets = [0, 0, 0], sizes = [1, 2, 128], strides = [1, 1, 1]} : vector<2x2x128xf32> to vector<1x2x128xf32>
    %77 = vector.shape_cast %76 : vector<1x2x128xf32> to vector<2x128xf32>
    %78 = vector.extract_strided_slice %75 {offsets = [1, 0, 0], sizes = [1, 2, 128], strides = [1, 1, 1]} : vector<2x2x128xf32> to vector<1x2x128xf32>
    %79 = vector.shape_cast %78 : vector<1x2x128xf32> to vector<2x128xf32>
    %c0_25 = arith.constant 0 : index
    %c0_26 = arith.constant 0 : index
    %80 = vector.load %arg9[%c0_25, %c0_26] : memref<6x128xf32, #tpu.memory_space<vmem>>, vector<6x128xf32>
    %81 = vector.extract_strided_slice %80 {offsets = [0, 0], sizes = [1, 128], strides = [1, 1]} : vector<6x128xf32> to vector<1x128xf32>
    %82 = vector.broadcast %81 : vector<1x128xf32> to vector<2x128xf32>
    %83 = arith.mulf %23, %82 : vector<2x128xf32>
    %cst_27 = arith.constant dense<0.000000e+00> : vector<2xf32>
    %84 = vector.multi_reduction <add>, %83, %cst_27 [1] : vector<2x128xf32> to vector<2xf32>
    %85 = vector.shape_cast %84 : vector<2xf32> to vector<2x1xf32>
    %86 = vector.extract_strided_slice %80 {offsets = [1, 0], sizes = [1, 128], strides = [1, 1]} : vector<6x128xf32> to vector<1x128xf32>
    %87 = vector.broadcast %86 : vector<1x128xf32> to vector<2x128xf32>
    %88 = arith.mulf %49, %87 : vector<2x128xf32>
    %cst_28 = arith.constant dense<0.000000e+00> : vector<2xf32>
    %89 = vector.multi_reduction <add>, %88, %cst_28 [1] : vector<2x128xf32> to vector<2xf32>
    %90 = vector.shape_cast %89 : vector<2xf32> to vector<2x1xf32>
    %91 = arith.addf %85, %90 : vector<2x1xf32>
    %92 = vector.extract_strided_slice %80 {offsets = [2, 0], sizes = [1, 128], strides = [1, 1]} : vector<6x128xf32> to vector<1x128xf32>
    %93 = vector.broadcast %92 : vector<1x128xf32> to vector<2x128xf32>
    %94 = arith.mulf %77, %93 : vector<2x128xf32>
    %cst_29 = arith.constant dense<0.000000e+00> : vector<2xf32>
    %95 = vector.multi_reduction <add>, %94, %cst_29 [1] : vector<2x128xf32> to vector<2xf32>
    %96 = vector.shape_cast %95 : vector<2xf32> to vector<2x1xf32>
    %97 = arith.addf %91, %96 : vector<2x1xf32>
    %98 = vector.extract_strided_slice %80 {offsets = [3, 0], sizes = [1, 128], strides = [1, 1]} : vector<6x128xf32> to vector<1x128xf32>
    %99 = vector.broadcast %98 : vector<1x128xf32> to vector<2x128xf32>
    %100 = arith.mulf %25, %99 : vector<2x128xf32>
    %cst_30 = arith.constant dense<0.000000e+00> : vector<2xf32>
    %101 = vector.multi_reduction <add>, %100, %cst_30 [1] : vector<2x128xf32> to vector<2xf32>
    %102 = vector.shape_cast %101 : vector<2xf32> to vector<2x1xf32>
    %103 = arith.addf %97, %102 : vector<2x1xf32>
    %104 = vector.extract_strided_slice %80 {offsets = [4, 0], sizes = [1, 128], strides = [1, 1]} : vector<6x128xf32> to vector<1x128xf32>
    %105 = vector.broadcast %104 : vector<1x128xf32> to vector<2x128xf32>
    %106 = arith.mulf %51, %105 : vector<2x128xf32>
    %cst_31 = arith.constant dense<0.000000e+00> : vector<2xf32>
    %107 = vector.multi_reduction <add>, %106, %cst_31 [1] : vector<2x128xf32> to vector<2xf32>
    %108 = vector.shape_cast %107 : vector<2xf32> to vector<2x1xf32>
    %109 = arith.addf %103, %108 : vector<2x1xf32>
    %110 = vector.extract_strided_slice %80 {offsets = [5, 0], sizes = [1, 128], strides = [1, 1]} : vector<6x128xf32> to vector<1x128xf32>
    %111 = vector.broadcast %110 : vector<1x128xf32> to vector<2x128xf32>
    %112 = arith.mulf %79, %111 : vector<2x128xf32>
    %cst_32 = arith.constant dense<0.000000e+00> : vector<2xf32>
    %113 = vector.multi_reduction <add>, %112, %cst_32 [1] : vector<2x128xf32> to vector<2xf32>
    %114 = vector.shape_cast %113 : vector<2xf32> to vector<2x1xf32>
    %115 = arith.addf %109, %114 : vector<2x1xf32>
    %c0_33 = arith.constant 0 : index
    %c0_34 = arith.constant 0 : index
    %116 = vector.load %arg10[%c0_33, %c0_34] : memref<1x1xf32, #tpu.memory_space<vmem>>, vector<1x1xf32>
    %117 = vector.broadcast %116 : vector<1x1xf32> to vector<2x1xf32>
    %118 = arith.addf %115, %117 : vector<2x1xf32>
    %119 = arith.negf %118 : vector<2x1xf32>
    %120 = math.exp %119 : vector<2x1xf32>
    %cst_35 = arith.constant 1.000000e+00 : f32
    %121 = vector.broadcast %cst_35 : f32 to vector<2x1xf32>
    %122 = arith.addf %121, %120 : vector<2x1xf32>
    %123 = arith.divf %121, %122 : vector<2x1xf32>
    %c0_36 = arith.constant 0 : index
    %c0_37 = arith.constant 0 : index
    %124 = vector.load %arg11[%c0_36, %c0_37] : memref<2x1xf32, #tpu.memory_space<vmem>>, vector<2x1xf32>
    tpu.vector_store %arg11[%c0_36, %c0_37], %123 {strides = array<i32>} : memref<2x1xf32, #tpu.memory_space<vmem>>, vector<2x1xf32>,
    return
  }
  func.func @transform_0(%arg0: i32) -> (i32, i32, i32) {
    %c0_i32 = arith.constant 0 : i32
    %c0_i32_0 = arith.constant 0 : i32
    %c0_i32_1 = arith.constant 0 : i32
    return %arg0, %c0_i32, %c0_i32_0 : i32, i32, i32
  }
  func.func @transform_1(%arg0: i32) -> (i32, i32, i32) {
    %c0_i32 = arith.constant 0 : i32
    %c0_i32_0 = arith.constant 0 : i32
    %c0_i32_1 = arith.constant 0 : i32
    return %arg0, %c0_i32, %c0_i32_0 : i32, i32, i32
  }
  func.func @transform_2(%arg0: i32) -> (i32, i32) {
    %c0_i32 = arith.constant 0 : i32
    %c0_i32_0 = arith.constant 0 : i32
    %c0_i32_1 = arith.constant 0 : i32
    return %c0_i32, %c0_i32_0 : i32, i32
  }
  func.func @transform_3(%arg0: i32) -> (i32, i32) {
    %c0_i32 = arith.constant 0 : i32
    %c0_i32_0 = arith.constant 0 : i32
    %c0_i32_1 = arith.constant 0 : i32
    return %c0_i32, %c0_i32_0 : i32, i32
  }
  func.func @transform_4(%arg0: i32) -> (i32, i32) {
    %c0_i32 = arith.constant 0 : i32
    %c0_i32_0 = arith.constant 0 : i32
    %c0_i32_1 = arith.constant 0 : i32
    return %c0_i32, %c0_i32_0 : i32, i32
  }
  func.func @transform_5(%arg0: i32) -> (i32, i32) {
    %c0_i32 = arith.constant 0 : i32
    %c0_i32_0 = arith.constant 0 : i32
    %c0_i32_1 = arith.constant 0 : i32
    return %c0_i32, %c0_i32_0 : i32, i32
  }
  func.func @transform_6(%arg0: i32) -> (i32, i32) {
    %c0_i32 = arith.constant 0 : i32
    %c0_i32_0 = arith.constant 0 : i32
    %c0_i32_1 = arith.constant 0 : i32
    return %c0_i32, %c0_i32_0 : i32, i32
  }
  func.func @transform_7(%arg0: i32) -> (i32, i32) {
    %c0_i32 = arith.constant 0 : i32
    %c0_i32_0 = arith.constant 0 : i32
    %c0_i32_1 = arith.constant 0 : i32
    return %c0_i32, %c0_i32_0 : i32, i32
  }
  func.func @transform_8(%arg0: i32) -> (i32, i32) {
    %c0_i32 = arith.constant 0 : i32
    %c0_i32_0 = arith.constant 0 : i32
    %c0_i32_1 = arith.constant 0 : i32
    return %c0_i32, %c0_i32_0 : i32, i32
  }
  func.func @transform_9(%arg0: i32) -> (i32, i32) {
    %c0_i32 = arith.constant 0 : i32
    %c0_i32_0 = arith.constant 0 : i32
    %c0_i32_1 = arith.constant 0 : i32
    return %c0_i32, %c0_i32_0 : i32, i32
  }
  func.func @transform_10(%arg0: i32) -> (i32, i32) {
    %c0_i32 = arith.constant 0 : i32
    %c0_i32_0 = arith.constant 0 : i32
    return %arg0, %c0_i32 : i32, i32
  }
}

</mosaic_0001>

<llo_original>
// kernel: tpu_custom_call.1
$region0: #{tpu_custom_call.1}
  #allocation0 [shape = 'u32[]', space=smem, size = 0x4, offset = 0x4, fixed_abs, tag = 'smem constant byte address 0x4 - core index']
  #allocation1 [shape = 'u32[72,128]{1,0:T(1,128)}', space=vmem, size = 0x9000, scoped, tag = 'internal scratch']
  #allocation2 [shape = 'f32[1,1]{1,0:T(1,128)S(1)}', space=vmem, size = 0x200, scoped, tag = 'scoped memory for tpu_custom_call.1']
  %s0 = inlined_call_operand.hbm [shape: f32[2,8,32], index: 0, kind: input, shape index: {}]
  %s1 = inlined_call_operand.hbm [shape: f32[2,8,32], index: 1, kind: input, shape index: {}]
  %s2 = inlined_call_operand.hbm [shape: f32[96,128], index: 2, kind: input, shape index: {}]
  %s3 = inlined_call_operand.vmem [shape: f32[1,128], index: 3, kind: input, shape index: {}]
  %s4 = inlined_call_operand.hbm [shape: f32[128,128], index: 4, kind: input, shape index: {}]
  %s5 = inlined_call_operand.hbm [shape: f32[1,128], index: 5, kind: input, shape index: {}]
  %s6 = inlined_call_operand.hbm [shape: f32[160,128], index: 6, kind: input, shape index: {}]
  %s7 = inlined_call_operand.hbm [shape: f32[1,128], index: 7, kind: input, shape index: {}]
  %s8 = inlined_call_operand.vmem [shape: f32[6,128], index: 8, kind: input, shape index: {}]
  %s9 = inlined_call_operand.<no memory space> [shape: f32[1,1], index: 9, kind: input, shape index: {}]
  %s10 = inlined_call_operand.vmem [shape: f32[2,1], index: 10, kind: output, shape index: {}]
  %s11 = sld [smem:[#allocation0]]
  $region78: #{tpu_custom_call.1} parent=0
    _
  %s13 = ssub.s32 1, %s11
  %s14 = scalar_select 0, %s13, %s11
  %v15 = vstv %s9
  %16 = vst [vmem:[#allocation2] sm:$0x1] %v15
  $region1: #{tpu_custom_call.1} parent=0
    #allocation3 [shape = 'u8[8192]{0}', space=vmem, size = 0x2000, scoped, tag = 'input window, operand 0, single buffered']
    #allocation4 [shape = 's32[1]{0}', space=sflag, size = 0x4, scoped, tag = 'scoped memory for tpu_custom_call.1']
    #allocation5 [shape = 'u8[8192]{0}', space=vmem, size = 0x2000, scoped, tag = 'input window, operand 1, single buffered']
    #allocation6 [shape = 's32[1]{0}', space=sflag, size = 0x4, scoped, tag = 'scoped memory for tpu_custom_call.1']
    #allocation7 [shape = 'u8[49152]{0}', space=vmem, size = 0xc000, scoped, tag = 'input window, operand 2, single buffered']
    #allocation8 [shape = 'u8[65536]{0}', space=vmem, size = 0x10000, scoped, tag = 'input window, operand 4, single buffered']
    #allocation9 [shape = 's32[1]{0}', space=sflag, size = 0x4, scoped, tag = 'scoped memory for tpu_custom_call.1']
    #allocation10 [shape = 'u8[512]{0}', space=vmem, size = 0x400, scoped, tag = 'input window, operand 5, single buffered']
    #allocation11 [shape = 'u8[81920]{0}', space=vmem, size = 0x14000, scoped, tag = 'input window, operand 6, single buffered']
    #allocation12 [shape = 's32[1]{0}', space=sflag, size = 0x4, scoped, tag = 'scoped memory for tpu_custom_call.1']
    #allocation13 [shape = 'u8[512]{0}', space=vmem, size = 0x400, scoped, tag = 'input window, operand 7, single buffered']
    %17 = vsyncpa [#allocation4], 0
    %18 = vsyncpa [#allocation6], 0
    %19 = vsyncpa [#allocation9], 0
    %20 = vsyncpa [#allocation12], 0
    // Predicated region
    $region2: #{tpu_custom_call.1} parent=1 // pred_check
      _
    $region3: #{tpu_custom_call.1} parent=1 // pred_check_branch
      %22 = sbr.rel (0) target = $region5
    $region4: #{tpu_custom_call.1} parent=1 // pred_region
      %24 = vsyncadd [#allocation4], 0
      %s25 = sshll.u32 %s0, 4
      %s26 = int_to_ptr.hbm [resolvable:$true] %s25
      %s27 = sshll.u32 [#allocation3], 4
      %s28 = int_to_ptr.vmem [resolvable:$true] %s27
      %33 = dma.hbm_to_vmem [thread:$0]  %s26, 256, %s28, [#allocation4], 128, 128, 8
    $region5: #{tpu_custom_call.1} parent=1 // pred_fallthru
      _
    // Predicated region
    $region6: #{tpu_custom_call.1} parent=1 // pred_check
      _
    $region7: #{tpu_custom_call.1} parent=1 // pred_check_branch
      %35 = sbr.rel (0) target = $region9
    $region8: #{tpu_custom_call.1} parent=1 // pred_region
      %37 = vsyncadd [#allocation6], 0
      %s38 = sshll.u32 %s1, 4
      %s39 = int_to_ptr.hbm [resolvable:$true] %s38
      %s40 = sshll.u32 [#allocation5], 4
      %s41 = int_to_ptr.vmem [resolvable:$true] %s40
      %46 = dma.hbm_to_vmem [thread:$0]  %s39, 256, %s41, [#allocation6], 128, 128, 8
    $region9: #{tpu_custom_call.1} parent=1 // pred_fallthru
      _
    // Predicated region
    $region10: #{tpu_custom_call.1} parent=1 // pred_check
      _
    $region11: #{tpu_custom_call.1} parent=1 // pred_check_branch
      %48 = sbr.rel (0) target = $region13
    $region12: #{tpu_custom_call.1} parent=1 // pred_region
      %50 = vsyncadd [#allocation6], 0
      %s51 = sshll.u32 %s2, 4
      %s52 = int_to_ptr.hbm [resolvable:$true] %s51
      %s53 = sshll.u32 [#allocation7], 4
      %s54 = int_to_ptr.vmem [resolvable:$true] %s53
      %59 = dma.hbm_to_vmem [thread:$0]  %s52, 1536, %s54, [#allocation6], 128, 128, 8
    $region13: #{tpu_custom_call.1} parent=1 // pred_fallthru
      _
    // Predicated region
    $region14: #{tpu_custom_call.1} parent=1 // pred_check
      _
    $region15: #{tpu_custom_call.1} parent=1 // pred_check_branch
      %61 = sbr.rel (0) target = $region17
    $region16: #{tpu_custom_call.1} parent=1 // pred_region
      _
    $region17: #{tpu_custom_call.1} parent=1 // pred_fallthru
      _
    // Predicated region
    $region18: #{tpu_custom_call.1} parent=1 // pred_check
      _
    $region19: #{tpu_custom_call.1} parent=1 // pred_check_branch
      %63 = sbr.rel (0) target = $region21
    $region20: #{tpu_custom_call.1} parent=1 // pred_region
      %65 = vsyncadd [#allocation9], 0
      %s66 = sshll.u32 %s4, 4
      %s67 = int_to_ptr.hbm [resolvable:$true] %s66
      %s68 = sshll.u32 [#allocation8], 4
      %s69 = int_to_ptr.vmem [resolvable:$true] %s68
      %74 = dma.hbm_to_vmem [thread:$0]  %s67, 2048, %s69, [#allocation9], 128, 128, 8
    $region21: #{tpu_custom_call.1} parent=1 // pred_fallthru
      _
    // Predicated region
    $region22: #{tpu_custom_call.1} parent=1 // pred_check
      _
    $region23: #{tpu_custom_call.1} parent=1 // pred_check_branch
      %76 = sbr.rel (0) target = $region25
    $region24: #{tpu_custom_call.1} parent=1 // pred_region
      %78 = vsyncadd [#allocation9], 0
      %s80 = sshll.u32 %s5, 4
      %s81 = int_to_ptr.hbm [resolvable:$true] %s80
      %s82 = sshll.u32 [#allocation10], 4
      %s83 = int_to_ptr.vmem [resolvable:$true] %s82
      %85 = dma.hbm_to_vmem [thread:$0]  %s81, 16, %s83, [#allocation9]
    $region25: #{tpu_custom_call.1} parent=1 // pred_fallthru
      _
    // Predicated region
    $region26: #{tpu_custom_call.1} parent=1 // pred_check
      _
    $region27: #{tpu_custom_call.1} parent=1 // pred_check_branch
      %87 = sbr.rel (0) target = $region29
    $region28: #{tpu_custom_call.1} parent=1 // pred_region
      %89 = vsyncadd [#allocation12], 0
      %s90 = sshll.u32 %s6, 4
      %s91 = int_to_ptr.hbm [resolvable:$true] %s90
      %s92 = sshll.u32 [#allocation11], 4
      %s93 = int_to_ptr.vmem [resolvable:$true] %s92
      %98 = dma.hbm_to_vmem [thread:$0]  %s91, 2560, %s93, [#allocation12], 128, 128, 8
    $region29: #{tpu_custom_call.1} parent=1 // pred_fallthru
      _
    // Predicated region
    $region30: #{tpu_custom_call.1} parent=1 // pred_check
      _
    $region31: #{tpu_custom_call.1} parent=1 // pred_check_branch
      %100 = sbr.rel (0) target = $region33
    $region32: #{tpu_custom_call.1} parent=1 // pred_region
      %102 = vsyncadd [#allocation12], 0
      %s104 = sshll.u32 %s7, 4
      %s105 = int_to_ptr.hbm [resolvable:$true] %s104
      %s106 = sshll.u32 [#allocation13], 4
      %s107 = int_to_ptr.vmem [resolvable:$true] %s106
      %109 = dma.hbm_to_vmem [thread:$0]  %s105, 16, %s107, [#allocation12]
    $region33: #{tpu_custom_call.1} parent=1 // pred_fallthru
      _
    // Predicated region
    $region34: #{tpu_custom_call.1} parent=1 // pred_check
      _
    $region35: #{tpu_custom_call.1} parent=1 // pred_check_branch
      %111 = sbr.rel (0) target = $region37
    $region36: #{tpu_custom_call.1} parent=1 // pred_region
      _
    $region37: #{tpu_custom_call.1} parent=1 // pred_fallthru
      _
    // Predicated region
    $region38: #{tpu_custom_call.1} parent=1 // pred_check
      _
    $region39: #{tpu_custom_call.1} parent=1 // pred_check_branch
      %113 = sbr.rel (0) target = $region41
    $region40: #{tpu_custom_call.1} parent=1 // pred_region
      _
    $region41: #{tpu_custom_call.1} parent=1 // pred_fallthru
      _
    // Predicated region
    $region42: #{tpu_custom_call.1} parent=1 // pred_check
      _
    $region43: #{tpu_custom_call.1} parent=1 // pred_check_branch
      %115 = sbr.rel (0) target = $region45
    $region44: #{tpu_custom_call.1} parent=1 // pred_region
      %117 = dma.done [#allocation4], 256
    $region45: #{tpu_custom_call.1} parent=1 // pred_fallthru
      _
    // Predicated region
    $region46: #{tpu_custom_call.1} parent=1 // pred_check
      _
    $region47: #{tpu_custom_call.1} parent=1 // pred_check_branch
      %119 = sbr.rel (0) target = $region49
    $region48: #{tpu_custom_call.1} parent=1 // pred_region
      %121 = dma.done [#allocation6], 256
    $region49: #{tpu_custom_call.1} parent=1 // pred_fallthru
      _
    // Predicated region
    $region50: #{tpu_custom_call.1} parent=1 // pred_check
      _
    $region51: #{tpu_custom_call.1} parent=1 // pred_check_branch
      %123 = sbr.rel (0) target = $region53
    $region52: #{tpu_custom_call.1} parent=1 // pred_region
      %125 = dma.done [#allocation6], 1536
    $region53: #{tpu_custom_call.1} parent=1 // pred_fallthru
      _
    // Predicated region
    $region54: #{tpu_custom_call.1} parent=1 // pred_check
      _
    $region55: #{tpu_custom_call.1} parent=1 // pred_check_branch
      %127 = sbr.rel (0) target = $region57
    $region56: #{tpu_custom_call.1} parent=1 // pred_region
      %129 = dma.done [#allocation9], 2048
    $region57: #{tpu_custom_call.1} parent=1 // pred_fallthru
      _
    // Predicated region
    $region58: #{tpu_custom_call.1} parent=1 // pred_check
      _
    $region59: #{tpu_custom_call.1} parent=1 // pred_check_branch
      %131 = sbr.rel (0) target = $region61
    $region60: #{tpu_custom_call.1} parent=1 // pred_region
      %133 = dma.done [#allocation9], 16
    $region61: #{tpu_custom_call.1} parent=1 // pred_fallthru
      _
    // Predicated region
    $region62: #{tpu_custom_call.1} parent=1 // pred_check
      _
    $region63: #{tpu_custom_call.1} parent=1 // pred_check_branch
      %135 = sbr.rel (0) target = $region65
    $region64: #{tpu_custom_call.1} parent=1 // pred_region
      %137 = dma.done [#allocation12], 2560
    $region65: #{tpu_custom_call.1} parent=1 // pred_fallthru
      _
    // Predicated region
    $region66: #{tpu_custom_call.1} parent=1 // pred_check
      _
    $region67: #{tpu_custom_call.1} parent=1 // pred_check_branch
      %139 = sbr.rel (0) target = $region69
    $region68: #{tpu_custom_call.1} parent=1 // pred_region
      %141 = dma.done [#allocation12], 16
    $region69: #{tpu_custom_call.1} parent=1 // pred_fallthru
      _
    %v142 = vld [vmem:[#allocation3] sm:$0xff]
    %v143 = vld [vmem:[#allocation3 + $0x8] sm:$0xff]
    %v144 = vld [vmem:[#allocation5] sm:$0xff]
    %v145 = vld [vmem:[#allocation5 + $0x8] sm:$0xff]
    %v148 = vrot.slane %v142, 1
    %v149 = vrot.slane %v143, 1
    %150 = vrot.lane.b32.xlu0 %v148, 32
    %v151 = vpop.permute.xlu0 %150
    %152 = vrot.lane.b32.xlu0 %v149, 32
    %v153 = vpop.permute.xlu0 %152
    %v156 = vrot.slane %v142, 2
    %v157 = vrot.slane %v143, 2
    %158 = vrot.lane.b32.xlu0 %v156, 64
    %v159 = vpop.permute.xlu0 %158
    %160 = vrot.lane.b32.xlu0 %v157, 64
    %v161 = vpop.permute.xlu0 %160
    %vm164 = vcmask 261120
    %v165 = vsel %vm164, %v142, %v151
    %v166 = vsel %vm164, %v143, %v153
    %vm167 = vcmask 523264
    %v168 = vsel %vm167, %v165, %v159
    %v169 = vsel %vm167, %v166, %v161
    %v172 = vrot.slane %v144, 1
    %v173 = vrot.slane %v145, 1
    %174 = vrot.lane.b32.xlu0 %v172, 32
    %v175 = vpop.permute.xlu0 %174
    %176 = vrot.lane.b32.xlu0 %v173, 32
    %v177 = vpop.permute.xlu0 %176
    %v180 = vrot.slane %v144, 2
    %v181 = vrot.slane %v145, 2
    %182 = vrot.lane.b32.xlu0 %v180, 64
    %v183 = vpop.permute.xlu0 %182
    %184 = vrot.lane.b32.xlu0 %v181, 64
    %v185 = vpop.permute.xlu0 %184
    %v188 = vsel %vm164, %v144, %v175
    %v189 = vsel %vm164, %v145, %v177
    %v190 = vsel %vm167, %v188, %v183
    %v191 = vsel %vm167, %v189, %v185
    %v196 = vrot.slane %v168, 2
    %v197 = vrot.slane %v168, 4
    %v198 = vrot.slane %v169, 2
    %v199 = vrot.slane %v169, 4
    %v200 = vrot.slane %v190, 2
    %v201 = vrot.slane %v190, 4
    %v202 = vrot.slane %v191, 2
    %v203 = vrot.slane %v191, 4
    %v204 = vld [vmem:[#allocation7] sm:$0xff]
    %v205 = vld [vmem:[#allocation7 + $0x8] sm:$0xff]
    %v206 = vld [vmem:[#allocation7 + $0x10] sm:$0xff]
    %v207 = vld [vmem:[#allocation7 + $0x18] sm:$0xff]
    %v208 = vld [vmem:[#allocation7 + $0x20] sm:$0xff]
    %v209 = vld [vmem:[#allocation7 + $0x28] sm:$0xff]
    %v210 = vld [vmem:[#allocation7 + $0x30] sm:$0xff]
    %v211 = vld [vmem:[#allocation7 + $0x38] sm:$0xff]
    %v212 = vld [vmem:[#allocation7 + $0x40] sm:$0xff]
    %v213 = vld [vmem:[#allocation7 + $0x48] sm:$0xff]
    %v214 = vld [vmem:[#allocation7 + $0x50] sm:$0xff]
    %v215 = vld [vmem:[#allocation7 + $0x58] sm:$0xff]
    %216 = vst [vmem:[#allocation1] ss:$4 sm:$0xff] %v168
    %s217 = scalar_lea.vmem [#allocation1], 1
    %218 = vst [vmem:[%s217] ss:$4 sm:$0xff] %v196
    %s219 = scalar_lea.vmem [#allocation1], 2
    %220 = vst [vmem:[%s219] ss:$4 sm:$0xff] %v197
    %s221 = scalar_lea.vmem [#allocation1], 3
    %222 = vst [vmem:[%s221] ss:$4 sm:$0xff] %v169
    %s223 = scalar_lea.vmem [#allocation1], 32
    %224 = vst [vmem:[%s223] ss:$4 sm:$0xff] %v198
    %s225 = scalar_lea.vmem [#allocation1], 33
    %226 = vst [vmem:[%s225] ss:$4 sm:$0xff] %v199
    %s227 = scalar_lea.vmem [#allocation1], 34
    %228 = vst [vmem:[%s227] ss:$4 sm:$0xff] %v190
    %s229 = scalar_lea.vmem [#allocation1], 35
    %230 = vst [vmem:[%s229] ss:$4 sm:$0xff] %v200
    %v231 = vld.sshfl [vmem:[#allocation1] sm:$0xff pattern:$0x73625140]
    %v232 = vld.sshfl [vmem:[#allocation1 + $0x20] sm:$0xff pattern:$0x73625140]
    %233 = vst [vmem:[#allocation1] ss:$4 sm:$0xff] %v201
    %234 = vst [vmem:[%s217] ss:$4 sm:$0xff] %v191
    %235 = vst [vmem:[%s219] ss:$4 sm:$0xff] %v202
    %236 = vst [vmem:[%s221] ss:$4 sm:$0xff] %v203
    %v237 = vld.sshfl [vmem:[#allocation1] sm:$0xff pattern:$0x73625140]
    %vm238 = vcmask 785408
    %v239 = vsel %vm238, %v231, 0
    %v241 = vsel %vm238, %v232, 0
    %v243 = vsel %vm238, %v237, 0
    %245 = vmatpush.msra.mxu0 0.0
    %246 = vmatpush.msra.mxu0 0.0
    %247 = vmatpush.msra.mxu0 0.0
    %248 = vmatpush.msra.mxu0 0.0
    %249 = vmatpush.msra.mxu0 %v215
    %250 = vmatpush.msra.mxu0 %v214
    %251 = vmatpush.msra.mxu0 %v213
    %252 = vmatpush.msra.mxu0 %v212
    %253 = vmatpush.msra.mxu0 %v211
    %254 = vmatpush.msra.mxu0 %v210
    %255 = vmatpush.msra.mxu0 %v209
    %256 = vmatpush.msra.mxu0 %v208
    %257 = vmatpush.msra.mxu0 %v207
    %258 = vmatpush.msra.mxu0 %v206
    %259 = vmatpush.msra.mxu0 %v205
    %260 = vmatpush.msra.mxu0 %v204
    %261 = vmatmul.f32.gmra.mxu0 %v239
    %v262 = vpop.f32.mrf.mxu0
    %v263 = vadd.f32 0.0, %v262
    %264 = vmatmul.f32.gmra.mxu0 %v241
    %v265 = vpop.f32.mrf.mxu0
    %v266 = vadd.f32 0.0, %v265
    %267 = vmatmul.f32.gmra.mxu0 %v243
    %v268 = vpop.f32.mrf.mxu0
    %v269 = vadd.f32 0.0, %v268
    %270 = vdwg.mxu0
    %v274 = vrot.slane %v263, 2
    %v275 = vrot.slane %v263, 4
    %v276 = vrot.slane %v263, 6
    %v277 = vrot.slane %v266, 2
    %v278 = vrot.slane %v266, 4
    %v279 = vrot.slane %v266, 6
    %v280 = vrot.slane %v269, 2
    %v281 = vrot.slane %v269, 4
    %v282 = vrot.slane %v269, 6
    %283 = vst [vmem:[#allocation1] ss:$4 sm:$0xff] %v263
    %s284 = scalar_lea.vmem [#allocation1], 1
    %285 = vst [vmem:[%s284] ss:$4 sm:$0xff] %v274
    %s286 = scalar_lea.vmem [#allocation1], 2
    %287 = vst [vmem:[%s286] ss:$4 sm:$0xff] %v275
    %v288 = vld.sshfl [vmem:[#allocation1] sm:$0xff pattern:$0x73625140]
    %s289 = scalar_lea.vmem [#allocation1], 32
    %290 = vst [vmem:[%s289] ss:$4 sm:$0xff] %v276
    %s291 = scalar_lea.vmem [#allocation1], 33
    %292 = vst [vmem:[%s291] ss:$4 sm:$0xff] %v266
    %s293 = scalar_lea.vmem [#allocation1], 34
    %294 = vst [vmem:[%s293] ss:$4 sm:$0xff] %v277
    %v295 = vld.sshfl [vmem:[#allocation1 + $0x20] sm:$0xff pattern:$0x73625140]
    %296 = vst [vmem:[#allocation1] ss:$4 sm:$0xff] %v278
    %297 = vst [vmem:[%s284] ss:$4 sm:$0xff] %v279
    %298 = vst [vmem:[%s286] ss:$4 sm:$0xff] %v269
    %v299 = vld.sshfl [vmem:[#allocation1] sm:$0xff pattern:$0x73625140]
    %300 = vst [vmem:[%s289] ss:$4 sm:$0xff] %v280
    %301 = vst [vmem:[%s291] ss:$4 sm:$0xff] %v281
    %302 = vst [vmem:[%s293] ss:$4 sm:$0xff] %v282
    %v303 = vld.sshfl [vmem:[#allocation1 + $0x20] sm:$0xff pattern:$0x73625140]
    %vm308 = vcmask 1045504
    %v309 = vsel %vm308, %v288, -inf
    %v310 = vrot.slane %v309, 4
    %v311 = vmax.f32 %v309, %v310
    %v312 = vrot.slane %v311, 2
    %v313 = vmax.f32 %v311, %v312
    %v314 = vrot.slane %v313, 1
    %v315 = vmax.f32 %v313, %v314
    %v316 = vsel %vm308, %v295, -inf
    %v317 = vrot.slane %v316, 4
    %v318 = vmax.f32 %v316, %v317
    %v319 = vrot.slane %v318, 2
    %v320 = vmax.f32 %v318, %v319
    %v321 = vrot.slane %v320, 1
    %v322 = vmax.f32 %v320, %v321
    %v323 = vsel %vm308, %v299, -inf
    %v324 = vrot.slane %v323, 4
    %v325 = vmax.f32 %v323, %v324
    %v326 = vrot.slane %v325, 2
    %v327 = vmax.f32 %v325, %v326
    %v328 = vrot.slane %v327, 1
    %v329 = vmax.f32 %v327, %v328
    %v330 = vsel %vm308, %v303, -inf
    %v331 = vrot.slane %v330, 4
    %v332 = vmax.f32 %v330, %v331
    %v333 = vrot.slane %v332, 2
    %v334 = vmax.f32 %v332, %v333
    %v335 = vrot.slane %v334, 1
    %v336 = vmax.f32 %v334, %v335
    %v337 = vld [vmem:[%s3] sm:$0x1]
    %v339 = vperm.slane %v337, 0
    %v341 = vadd.f32 %v315, %v339
    %v342 = vadd.f32 %v322, %v339
    %v343 = vadd.f32 %v329, %v339
    %v344 = vadd.f32 %v336, %v339
    %v345 = vmax.f32 %v341, 0.0
    %v346 = vmax.f32 %v342, 0.0
    %v347 = vmax.f32 %v343, 0.0
    %v348 = vmax.f32 %v344, 0.0
    %v349 = vrot.slane %v142, 3
    %v350 = vrot.slane %v143, 3
    %351 = vrot.lane.b32.xlu0 %v349, 96
    %v352 = vpop.permute.xlu0 %351
    %353 = vrot.lane.b32.xlu0 %v350, 96
    %v354 = vpop.permute.xlu0 %353
    %v357 = vsel %vm238, %v168, %v352
    %v358 = vsel %vm238, %v169, %v354
    %v359 = vrot.slane %v144, 3
    %v360 = vrot.slane %v145, 3
    %361 = vrot.lane.b32.xlu0 %v359, 96
    %v362 = vpop.permute.xlu0 %361
    %363 = vrot.lane.b32.xlu0 %v360, 96
    %v364 = vpop.permute.xlu0 %363
    %v367 = vsel %vm238, %v190, %v362
    %v368 = vsel %vm238, %v191, %v364
    %v373 = vrot.slane %v357, 1
    %v374 = vrot.slane %v357, 2
    %v375 = vrot.slane %v357, 3
    %v376 = vrot.slane %v357, 4
    %v377 = vrot.slane %v358, 1
    %v378 = vrot.slane %v358, 2
    %v379 = vrot.slane %v358, 3
    %v380 = vrot.slane %v358, 4
    %v381 = vrot.slane %v367, 1
    %v382 = vrot.slane %v367, 2
    %v383 = vrot.slane %v367, 3
    %v384 = vrot.slane %v367, 4
    %v385 = vrot.slane %v368, 1
    %v386 = vrot.slane %v368, 2
    %v387 = vrot.slane %v368, 3
    %v388 = vrot.slane %v368, 4
    %v389 = vld [vmem:[#allocation8] sm:$0xff]
    %v390 = vld [vmem:[#allocation8 + $0x8] sm:$0xff]
    %v391 = vld [vmem:[#allocation8 + $0x10] sm:$0xff]
    %v392 = vld [vmem:[#allocation8 + $0x18] sm:$0xff]
    %v393 = vld [vmem:[#allocation8 + $0x20] sm:$0xff]
    %v394 = vld [vmem:[#allocation8 + $0x28] sm:$0xff]
    %v395 = vld [vmem:[#allocation8 + $0x30] sm:$0xff]
    %v396 = vld [vmem:[#allocation8 + $0x38] sm:$0xff]
    %v397 = vld [vmem:[#allocation8 + $0x40] sm:$0xff]
    %v398 = vld [vmem:[#allocation8 + $0x48] sm:$0xff]
    %v399 = vld [vmem:[#allocation8 + $0x50] sm:$0xff]
    %v400 = vld [vmem:[#allocation8 + $0x58] sm:$0xff]
    %v401 = vld [vmem:[#allocation8 + $0x60] sm:$0xff]
    %v402 = vld [vmem:[#allocation8 + $0x68] sm:$0xff]
    %v403 = vld [vmem:[#allocation8 + $0x70] sm:$0xff]
    %v404 = vld [vmem:[#allocation8 + $0x78] sm:$0xff]
    %405 = vst [vmem:[#allocation1] ss:$9 sm:$0xff] %v357
    %s406 = scalar_lea.vmem [#allocation1], 1
    %407 = vst [vmem:[%s406] ss:$9 sm:$0xff] %v373
    %s408 = scalar_lea.vmem [#allocation1], 2
    %409 = vst [vmem:[%s408] ss:$9 sm:$0xff] %v374
    %s410 = scalar_lea.vmem [#allocation1], 3
    %411 = vst [vmem:[%s410] ss:$9 sm:$0xff] %v375
    %s412 = scalar_lea.vmem [#allocation1], 4
    %413 = vst [vmem:[%s412] ss:$9 sm:$0xff] %v376
    %s414 = scalar_lea.vmem [#allocation1], 5
    %415 = vst [vmem:[%s414] ss:$9 sm:$0xff] %v358
    %s416 = scalar_lea.vmem [#allocation1], 6
    %417 = vst [vmem:[%s416] ss:$9 sm:$0xff] %v377
    %s418 = scalar_lea.vmem [#allocation1], 7
    %419 = vst [vmem:[%s418] ss:$9 sm:$0xff] %v378
    %v420 = vld [vmem:[#allocation1] sm:$0xff]
    %421 = vst [vmem:[#allocation1] ss:$9 sm:$0xff] %v379
    %422 = vst [vmem:[%s406] ss:$9 sm:$0xff] %v380
    %423 = vst [vmem:[%s408] ss:$9 sm:$0xff] %v367
    %424 = vst [vmem:[%s410] ss:$9 sm:$0xff] %v381
    %425 = vst [vmem:[%s412] ss:$9 sm:$0xff] %v382
    %426 = vst [vmem:[%s414] ss:$9 sm:$0xff] %v383
    %427 = vst [vmem:[%s416] ss:$9 sm:$0xff] %v384
    %428 = vst [vmem:[%s418] ss:$9 sm:$0xff] %v368
    %v429 = vld [vmem:[#allocation1] sm:$0xff]
    %430 = vst [vmem:[#allocation1] ss:$9 sm:$0xff] %v385
    %431 = vst [vmem:[%s406] ss:$9 sm:$0xff] %v386
    %432 = vst [vmem:[%s408] ss:$9 sm:$0xff] %v387
    %433 = vst [vmem:[%s410] ss:$9 sm:$0xff] %v388
    %v434 = vld [vmem:[#allocation1] sm:$0xff]
    %438 = vmatpush.msra.mxu0 %v404
    %439 = vmatpush.msra.mxu0 %v403
    %440 = vmatpush.msra.mxu0 %v402
    %441 = vmatpush.msra.mxu0 %v401
    %442 = vmatpush.msra.mxu0 %v400
    %443 = vmatpush.msra.mxu0 %v399
    %444 = vmatpush.msra.mxu0 %v398
    %445 = vmatpush.msra.mxu0 %v397
    %446 = vmatpush.msra.mxu0 %v396
    %447 = vmatpush.msra.mxu0 %v395
    %448 = vmatpush.msra.mxu0 %v394
    %449 = vmatpush.msra.mxu0 %v393
    %450 = vmatpush.msra.mxu0 %v392
    %451 = vmatpush.msra.mxu0 %v391
    %452 = vmatpush.msra.mxu0 %v390
    %453 = vmatpush.msra.mxu0 %v389
    %454 = vmatmul.f32.gmra.mxu0 %v420
    %v455 = vpop.f32.mrf.mxu0
    %v456 = vadd.f32 0.0, %v455
    %457 = vmatmul.f32.gmra.mxu0 %v429
    %v458 = vpop.f32.mrf.mxu0
    %v459 = vadd.f32 0.0, %v458
    %460 = vmatmul.f32.gmra.mxu0 %v434
    %v461 = vpop.f32.mrf.mxu0
    %v462 = vadd.f32 0.0, %v461
    %463 = vdwg.mxu0
    %v467 = vrot.slane %v456, 1
    %v468 = vrot.slane %v456, 2
    %v469 = vrot.slane %v456, 3
    %v470 = vrot.slane %v456, 4
    %v471 = vrot.slane %v456, 5
    %v472 = vrot.slane %v456, 6
    %v473 = vrot.slane %v456, 7
    %v474 = vrot.slane %v459, 1
    %v475 = vrot.slane %v459, 2
    %v476 = vrot.slane %v459, 3
    %v477 = vrot.slane %v459, 4
    %v478 = vrot.slane %v459, 5
    %v479 = vrot.slane %v459, 6
    %v480 = vrot.slane %v459, 7
    %v481 = vrot.slane %v462, 1
    %v482 = vrot.slane %v462, 2
    %v483 = vrot.slane %v462, 3
    %484 = vst [vmem:[#allocation1] ss:$9 sm:$0xff] %v456
    %s485 = scalar_lea.vmem [#allocation1], 1
    %486 = vst [vmem:[%s485] ss:$9 sm:$0xff] %v467
    %s487 = scalar_lea.vmem [#allocation1], 2
    %488 = vst [vmem:[%s487] ss:$9 sm:$0xff] %v468
    %s489 = scalar_lea.vmem [#allocation1], 3
    %490 = vst [vmem:[%s489] ss:$9 sm:$0xff] %v469
    %s491 = scalar_lea.vmem [#allocation1], 4
    %492 = vst [vmem:[%s491] ss:$9 sm:$0xff] %v470
    %v493 = vld [vmem:[#allocation1] sm:$0xff]
    %494 = vst [vmem:[#allocation1] ss:$9 sm:$0xff] %v471
    %495 = vst [vmem:[%s485] ss:$9 sm:$0xff] %v472
    %496 = vst [vmem:[%s487] ss:$9 sm:$0xff] %v473
    %497 = vst [vmem:[%s489] ss:$9 sm:$0xff] %v459
    %498 = vst [vmem:[%s491] ss:$9 sm:$0xff] %v474
    %v499 = vld [vmem:[#allocation1] sm:$0xff]
    %500 = vst [vmem:[#allocation1] ss:$9 sm:$0xff] %v475
    %501 = vst [vmem:[%s485] ss:$9 sm:$0xff] %v476
    %502 = vst [vmem:[%s487] ss:$9 sm:$0xff] %v477
    %503 = vst [vmem:[%s489] ss:$9 sm:$0xff] %v478
    %504 = vst [vmem:[%s491] ss:$9 sm:$0xff] %v479
    %v505 = vld [vmem:[#allocation1] sm:$0xff]
    %506 = vst [vmem:[#allocation1] ss:$9 sm:$0xff] %v480
    %507 = vst [vmem:[%s485] ss:$9 sm:$0xff] %v462
    %508 = vst [vmem:[%s487] ss:$9 sm:$0xff] %v481
    %509 = vst [vmem:[%s489] ss:$9 sm:$0xff] %v482
    %510 = vst [vmem:[%s491] ss:$9 sm:$0xff] %v483
    %v511 = vld [vmem:[#allocation1] sm:$0xff]
    %vm516 = vcmask 1044480
    %v517 = vsel %vm516, %v493, -inf
    %v518 = vrot.slane %v517, 4
    %v519 = vmax.f32 %v517, %v518
    %v520 = vrot.slane %v519, 2
    %v521 = vmax.f32 %v519, %v520
    %v522 = vrot.slane %v521, 1
    %v523 = vmax.f32 %v521, %v522
    %v524 = vsel %vm516, %v499, -inf
    %v525 = vrot.slane %v524, 4
    %v526 = vmax.f32 %v524, %v525
    %v527 = vrot.slane %v526, 2
    %v528 = vmax.f32 %v526, %v527
    %v529 = vrot.slane %v528, 1
    %v530 = vmax.f32 %v528, %v529
    %v531 = vsel %vm516, %v505, -inf
    %v532 = vrot.slane %v531, 4
    %v533 = vmax.f32 %v531, %v532
    %v534 = vrot.slane %v533, 2
    %v535 = vmax.f32 %v533, %v534
    %v536 = vrot.slane %v535, 1
    %v537 = vmax.f32 %v535, %v536
    %v538 = vsel %vm516, %v511, -inf
    %v539 = vrot.slane %v538, 4
    %v540 = vmax.f32 %v538, %v539
    %v541 = vrot.slane %v540, 2
    %v542 = vmax.f32 %v540, %v541
    %v543 = vrot.slane %v542, 1
    %v544 = vmax.f32 %v542, %v543
    %v545 = vld [vmem:[#allocation10] sm:$0x1]
    %v547 = vperm.slane %v545, 0
    %v549 = vadd.f32 %v523, %v547
    %v550 = vadd.f32 %v530, %v547
    %v551 = vadd.f32 %v537, %v547
    %v552 = vadd.f32 %v544, %v547
    %v553 = vmax.f32 %v549, 0.0
    %v554 = vmax.f32 %v550, 0.0
    %v555 = vmax.f32 %v551, 0.0
    %v556 = vmax.f32 %v552, 0.0
    %v557 = vrot.slane %v142, 4
    %v558 = vrot.slane %v143, 4
    %v559 = vrot.slane %v144, 4
    %v560 = vrot.slane %v145, 4
    %v561 = vrot.slane %v557, 4
    %v562 = vrot.slane %v558, 4
    %v563 = vrot.slane %v559, 4
    %v564 = vrot.slane %v560, 4
    %vm565 = vcmask 1043456
    %v566 = vsel %vm565, %v357, %v561
    %v567 = vsel %vm565, %v358, %v562
    %v568 = vsel %vm565, %v367, %v563
    %v569 = vsel %vm565, %v368, %v564
    %v570 = vld [vmem:[#allocation11] sm:$0xff]
    %v571 = vld [vmem:[#allocation11 + $0x8] sm:$0xff]
    %v572 = vld [vmem:[#allocation11 + $0x10] sm:$0xff]
    %v573 = vld [vmem:[#allocation11 + $0x18] sm:$0xff]
    %v574 = vld [vmem:[#allocation11 + $0x20] sm:$0xff]
    %v575 = vld [vmem:[#allocation11 + $0x28] sm:$0xff]
    %v576 = vld [vmem:[#allocation11 + $0x30] sm:$0xff]
    %v577 = vld [vmem:[#allocation11 + $0x38] sm:$0xff]
    %v578 = vld [vmem:[#allocation11 + $0x40] sm:$0xff]
    %v579 = vld [vmem:[#allocation11 + $0x48] sm:$0xff]
    %v580 = vld [vmem:[#allocation11 + $0x50] sm:$0xff]
    %v581 = vld [vmem:[#allocation11 + $0x58] sm:$0xff]
    %v582 = vld [vmem:[#allocation11 + $0x60] sm:$0xff]
    %v583 = vld [vmem:[#allocation11 + $0x68] sm:$0xff]
    %v584 = vld [vmem:[#allocation11 + $0x70] sm:$0xff]
    %v585 = vld [vmem:[#allocation11 + $0x78] sm:$0xff]
    %v586 = vld [vmem:[#allocation11 + $0x80] sm:$0xff]
    %v587 = vld [vmem:[#allocation11 + $0x88] sm:$0xff]
    %v588 = vld [vmem:[#allocation11 + $0x90] sm:$0xff]
    %v589 = vld [vmem:[#allocation11 + $0x98] sm:$0xff]
    %590 = vst [vmem:[#allocation1] ss:$2 sm:$0xff] %v566
    %s591 = scalar_lea.vmem [#allocation1], 1
    %592 = vst [vmem:[%s591] ss:$2 sm:$0xff] %v567
    %s593 = scalar_lea.vmem [#allocation1], 16
    %594 = vst [vmem:[%s593] ss:$2 sm:$0xff] %v568
    %s595 = scalar_lea.vmem [#allocation1], 17
    %596 = vst [vmem:[%s595] ss:$2 sm:$0xff] %v569
    %v597 = vld.sshfl [vmem:[#allocation1] sm:$0xff pattern:$0x75316420]
    %v598 = vld.sshfl [vmem:[#allocation1 + $0x8] sm:$0xff pattern:$0x75316420]
    %v599 = vld.sshfl [vmem:[#allocation1 + $0x10] sm:$0xff pattern:$0x75316420]
    %v600 = vld.sshfl [vmem:[#allocation1 + $0x18] sm:$0xff pattern:$0x75316420]
    %v603 = vsel %vm164, %v598, 0
    %v605 = vsel %vm164, %v600, 0
    %607 = vmatpush.msra.mxu0 %v585
    %608 = vmatpush.msra.mxu0 %v584
    %609 = vmatpush.msra.mxu0 %v583
    %610 = vmatpush.msra.mxu0 %v582
    %611 = vmatpush.msra.mxu0 %v581
    %612 = vmatpush.msra.mxu0 %v580
    %613 = vmatpush.msra.mxu0 %v579
    %614 = vmatpush.msra.mxu0 %v578
    %615 = vmatpush.msra.mxu0 %v577
    %616 = vmatpush.msra.mxu0 %v576
    %617 = vmatpush.msra.mxu0 %v575
    %618 = vmatpush.msra.mxu0 %v574
    %619 = vmatpush.msra.mxu0 %v573
    %620 = vmatpush.msra.mxu0 %v572
    %621 = vmatpush.msra.mxu0 %v571
    %622 = vmatpush.msra.mxu0 %v570
    %623 = vmatmul.f32.gmra.mxu0 %v597
    %v624 = vpop.f32.mrf.mxu0
    %v625 = vadd.f32 0.0, %v624
    %626 = vmatmul.f32.gmra.mxu0 %v599
    %v627 = vpop.f32.mrf.mxu0
    %v628 = vadd.f32 0.0, %v627
    %629 = vdwg.mxu0
    %630 = vmatpush.msra.mxu0 0.0
    %631 = vmatpush.msra.mxu0 0.0
    %632 = vmatpush.msra.mxu0 0.0
    %633 = vmatpush.msra.mxu0 0.0
    %634 = vmatpush.msra.mxu0 0.0
    %635 = vmatpush.msra.mxu0 0.0
    %636 = vmatpush.msra.mxu0 0.0
    %637 = vmatpush.msra.mxu0 0.0
    %638 = vmatpush.msra.mxu0 0.0
    %639 = vmatpush.msra.mxu0 0.0
    %640 = vmatpush.msra.mxu0 0.0
    %641 = vmatpush.msra.mxu0 0.0
    %642 = vmatpush.msra.mxu0 %v589
    %643 = vmatpush.msra.mxu0 %v588
    %644 = vmatpush.msra.mxu0 %v587
    %645 = vmatpush.msra.mxu0 %v586
    %646 = vmatmul.f32.gmra.mxu0 %v603
    %v647 = vpop.f32.mrf.mxu0
    %v648 = vadd.f32 %v625, %v647
    %649 = vmatmul.f32.gmra.mxu0 %v605
    %v650 = vpop.f32.mrf.mxu0
    %v651 = vadd.f32 %v628, %v650
    %652 = vdwg.mxu0
    %v655 = vrot.slane %v648, 4
    %v656 = vrot.slane %v651, 4
    %v659 = vsel %vm565, %v648, -inf
    %v660 = vrot.slane %v659, 4
    %v661 = vmax.f32 %v659, %v660
    %v662 = vrot.slane %v661, 2
    %v663 = vmax.f32 %v661, %v662
    %v664 = vrot.slane %v663, 1
    %v665 = vmax.f32 %v663, %v664
    %v666 = vsel %vm565, %v655, -inf
    %v667 = vrot.slane %v666, 4
    %v668 = vmax.f32 %v666, %v667
    %v669 = vrot.slane %v668, 2
    %v670 = vmax.f32 %v668, %v669
    %v671 = vrot.slane %v670, 1
    %v672 = vmax.f32 %v670, %v671
    %v673 = vsel %vm565, %v651, -inf
    %v674 = vrot.slane %v673, 4
    %v675 = vmax.f32 %v673, %v674
    %v676 = vrot.slane %v675, 2
    %v677 = vmax.f32 %v675, %v676
    %v678 = vrot.slane %v677, 1
    %v679 = vmax.f32 %v677, %v678
    %v680 = vsel %vm565, %v656, -inf
    %v681 = vrot.slane %v680, 4
    %v682 = vmax.f32 %v680, %v681
    %v683 = vrot.slane %v682, 2
    %v684 = vmax.f32 %v682, %v683
    %v685 = vrot.slane %v684, 1
    %v686 = vmax.f32 %v684, %v685
    %v687 = vld [vmem:[#allocation13] sm:$0x1]
    %v689 = vperm.slane %v687, 0
    %v691 = vadd.f32 %v665, %v689
    %v692 = vadd.f32 %v672, %v689
    %v693 = vadd.f32 %v679, %v689
    %v694 = vadd.f32 %v686, %v689
    %v695 = vmax.f32 %v691, 0.0
    %v696 = vmax.f32 %v692, 0.0
    %v697 = vmax.f32 %v693, 0.0
    %v698 = vmax.f32 %v694, 0.0
    %v699 = vld [vmem:[%s8] sm:$0x3f]
    %v700 = vperm.slane %v699, 0
    %v701 = vmul.f32 %v345, %v700
    %v702 = vmul.f32 %v346, %v700
    %v705 = vrot.slane %v702, 7
    %vm706 = vcmask 1041409
    %v707 = vsel %vm706, %v705, %v701
    %vm709 = vcmask 1041408
    %v710 = vsel %vm709, %v707, 0.0
    %711 = vadd.xlane.f32.xlu0 %v710
    %v712 = vpop.xlane.xlu0 %711
    %v713 = vperm.slane %v699, 1
    %v714 = vmul.f32 %v553, %v713
    %v715 = vmul.f32 %v554, %v713
    %v718 = vrot.slane %v715, 7
    %v719 = vsel %vm706, %v718, %v714
    %v721 = vsel %vm709, %v719, 0.0
    %722 = vadd.xlane.f32.xlu0 %v721
    %v723 = vpop.xlane.xlu0 %722
    %v724 = vadd.f32 %v712, %v723
    %v725 = vperm.slane %v699, 2
    %v726 = vmul.f32 %v695, %v725
    %v727 = vmul.f32 %v696, %v725
    %v730 = vrot.slane %v727, 7
    %v731 = vsel %vm706, %v730, %v726
    %v733 = vsel %vm709, %v731, 0.0
    %734 = vadd.xlane.f32.xlu0 %v733
    %v735 = vpop.xlane.xlu0 %734
    %v736 = vadd.f32 %v724, %v735
    %v737 = vperm.slane %v699, 3
    %v738 = vmul.f32 %v347, %v737
    %v739 = vmul.f32 %v348, %v737
    %v742 = vrot.slane %v739, 7
    %v743 = vsel %vm706, %v742, %v738
    %v745 = vsel %vm709, %v743, 0.0
    %746 = vadd.xlane.f32.xlu0 %v745
    %v747 = vpop.xlane.xlu0 %746
    %v748 = vadd.f32 %v736, %v747
    %v749 = vperm.slane %v699, 4
    %v750 = vmul.f32 %v555, %v749
    %v751 = vmul.f32 %v556, %v749
    %v754 = vrot.slane %v751, 7
    %v755 = vsel %vm706, %v754, %v750
    %v757 = vsel %vm709, %v755, 0.0
    %758 = vadd.xlane.f32.xlu0 %v757
    %v759 = vpop.xlane.xlu0 %758
    %v760 = vadd.f32 %v748, %v759
    %v761 = vperm.slane %v699, 5
    %v762 = vmul.f32 %v697, %v761
    %v763 = vmul.f32 %v698, %v761
    %v766 = vrot.slane %v763, 7
    %v767 = vsel %vm706, %v766, %v762
    %v769 = vsel %vm709, %v767, 0.0
    %770 = vadd.xlane.f32.xlu0 %v769
    %v771 = vpop.xlane.xlu0 %770
    %v772 = vadd.f32 %v760, %v771
    %v773 = vld [vmem:[#allocation2] sm:$0x1]
    %v775 = vperm.slane %v773, 0
    %v777 = vadd.f32 %v772, %v775
    %v778 = vxor.u32 %v777, 2147483648
    %v779 = vmul.f32 %v778, 1.442695
    %v780 = vpow.pop %v779
    %v781 = vadd.f32 %v780, 1.0
    %v782 = vrcp.pop %v781
    %v783 = vmul.f32 %v781, %v782
    %v784 = vsub.f32 1.0, %v783
    %v785 = vmul.f32 %v782, %v784
    %v786 = vadd.f32 %v782, %v785
    %vm787 = vweird.f32 %v781
    %vm788 = vweird.f32 %v782
    %vm789 = vmor %vm787, %vm788
    %v790 = vsel %vm789, %v782, %v786
    %v791 = vand.u32 2147483647, %v781
    %vm792 = vcmp.eq.f32.partialorder %v791, 8.507059e+37
    %v793 = vand.u32 %v781, 2147483648
    %v794 = vor.u32 1.1754944e-38, %v793
    %v795 = vsel %vm792, %v794, %v790
    %v796 = vmul.f32 1.0, %v795
    %vm797 = vcmask 1024
    %798 = vst.msk [vmem:[%s10] sm:$0x3] %vm797, %v796
    // Predicated region
    $region70: #{tpu_custom_call.1} parent=1 // pred_check
      _
    $region71: #{tpu_custom_call.1} parent=1 // pred_check_branch
      %800 = sbr.rel (0) target = $region73
    $region72: #{tpu_custom_call.1} parent=1 // pred_region
      _
    $region73: #{tpu_custom_call.1} parent=1 // pred_fallthru
      _
    // Predicated region
    $region74: #{tpu_custom_call.1} parent=1 // pred_check
      _
    $region75: #{tpu_custom_call.1} parent=1 // pred_check_branch
      %802 = sbr.rel (0) target = $region77
    $region76: #{tpu_custom_call.1} parent=1 // pred_region
      _
    $region77: #{tpu_custom_call.1} parent=1 // pred_fallthru
      _
    %803 = vsyncpa [#allocation4], 1
    %804 = vsyncpa [#allocation6], 1
    %805 = vsyncpa [#allocation9], 1
    %806 = vsyncpa [#allocation12], 1

</llo_original>
